<compile_context>
chip_gen: v6e
topology: v6e:2x2x1
jax: 0.10.0
libtpu: 0.0.40
codegen_flags: <defaults>
</compile_context>

<pallas_src>
import jax
import jax.numpy as jnp
from jax.experimental import pallas as pl
from jax.experimental.pallas import tpu as pltpu


def _round_up(a: int, m: int) -> int:
    return (a + m - 1) // m * m


def _cdiv(a: int, b: int) -> int:
    return -(-a // b)


def _im2col_patches(x, ph, pw):
    """x: (B, C, H, W) NCHW -> (B, n_patches, ph*pw*C) with (ph, pw, C) ordering."""
    B, C, H, W = x.shape
    Hp, Wp = H // ph, W // pw
    x = jnp.transpose(x, (0, 2, 3, 1))              # NHWC (single layout change)
    x = x.reshape(B, Hp, ph, Wp, pw, C)
    x = jnp.transpose(x, (0, 1, 3, 2, 4, 5))        # (B, Hp, Wp, ph, pw, C)
    return x.reshape(B, Hp * Wp, ph * pw * C)       # (B, N, K)


def _embed_kernel(p_ref, w_ref, b_ref, pos_ref, cls_ref, o_ref):
    tb, tm, k_pad = p_ref.shape
    hidden = w_ref.shape[1]

    # One MXU dot over all tb*tm rows; K is fully resident (no K grid axis), f32 acc.
    p2d = p_ref[...].reshape(tb * tm, k_pad)
    acc = jnp.dot(p2d, w_ref[...], preferred_element_type=jnp.float32)
    acc = acc.reshape(tb, tm, hidden)

    pos = pos_ref[...].astype(jnp.float32)          # (1, tm, hidden): bf16 stream -> f32
    out = acc + b_ref[...] + pos                    # fused bias (f32) + pos epilogue
    o_ref[...] = out.astype(o_ref.dtype)

    # Row 0 of the first sequence tile is the cls slot: cls_token + pos_embed[0].
    # Cheap single-row overwrite instead of a full-tile iota/select.
    @pl.when(pl.program_id(0) == 0)
    def _():
        cls_row = cls_ref[...] + pos[0, 0:1, :]                      # (1, hidden) f32
        o_ref[:, pl.ds(0, 1), :] = jnp.broadcast_to(
            cls_row[None], (tb, 1, hidden)).astype(o_ref.dtype)


def vit_embeddings(x, conv_w, conv_b, cls_token, pos_embed,
                   *, compute_dtype=jnp.bfloat16, tm_cap=512):
    """Forward pass of ViT Embeddings (eval mode: dropout == identity).

    x:          (B, C, H, W)              NCHW image batch
    conv_w:     (hidden, C, ph, pw)       torch Conv2d weight layout
    conv_b:     (hidden,)
    cls_token:  (1, 1, hidden)
    pos_embed:  (1, n_patches + 1, hidden)
    returns:    (B, n_patches + 1, hidden) in x.dtype
    """
    B, C, H, W = x.shape
    hidden, C_w, ph, pw = conv_w.shape
    assert C == C_w and H % ph == 0 and W % pw == 0
    Hp, Wp = H // ph, W // pw
    N = Hp * Wp
    S = N + 1
    K = C * ph * pw
    out_dtype = x.dtype

    # --- tiling plan -----------------------------------------------------------------
    K_pad = _round_up(K, 128)
    S8 = _round_up(S, 8)
    n_tiles = _cdiv(S8, tm_cap)
    # batch block: largest of (4, 2, 1) dividing B
    tb = next(c for c in (4, 2, 1) if B % c == 0)
    # keep at least 2 grid tiles so a second TensorCore (v7x) has work at small batch
    if n_tiles * (B // tb) < 2 and S8 >= 16:
        n_tiles = 2
    tm = _round_up(_cdiv(S8, n_tiles), 8)
    S_pad = n_tiles * tm
    # keep per-step row count bounded (VMEM / vreg pressure)
    while tb > 1 and tb * tm > 1024:
        tb //= 2

    # --- plain-JAX glue (layout only), done in bf16 ------------------------------------
    patches = _im2col_patches(x.astype(compute_dtype), ph, pw)             # (B, N, K) bf16
    w_km = (jnp.transpose(conv_w, (2, 3, 1, 0))                            # (ph, pw, C, hid)
            .reshape(K, hidden).astype(compute_dtype))                     # (K, hidden) bf16

    # Row 0 per batch is a dummy zero row (cls slot); tail rows & K zero-padded.
    patches = jnp.pad(patches, ((0, 0), (1, S_pad - 1 - N), (0, K_pad - K)))
    w_km = jnp.pad(w_km, ((0, K_pad - K), (0, 0)))
    pos = jnp.pad(pos_embed, ((0, 0), (0, S_pad - S), (0, 0))).astype(compute_dtype)
    bias = conv_b.reshape(1, hidden).astype(jnp.float32)
    cls = cls_token.reshape(1, hidden).astype(jnp.float32)

    grid = (n_tiles, B // tb)   # seq tiles outer, batch inner -> pos fetched n_tiles times

    out = pl.pallas_call(
        _embed_kernel,
        out_shape=jax.ShapeDtypeStruct((B, S_pad, hidden), out_dtype),
        grid_spec=pltpu.PrefetchScalarGridSpec(
            num_scalar_prefetch=0,
            grid=grid,
            in_specs=[
                pl.BlockSpec((tb, tm, K_pad), lambda i, b: (b, i, 0)),    # patches (streamed)
                pl.BlockSpec((K_pad, hidden), lambda i, b: (0, 0)),       # weight  (resident)
                pl.BlockSpec((1, hidden), lambda i, b: (0, 0)),           # bias    (resident)
                pl.BlockSpec((1, tm, hidden), lambda i, b: (0, i, 0)),    # pos tile (bf16)
                pl.BlockSpec((1, hidden), lambda i, b: (0, 0)),           # cls     (resident)
            ],
            out_specs=pl.BlockSpec((tb, tm, hidden), lambda i, b: (b, i, 0)),
        ),
        compiler_params=pltpu.CompilerParams(
            dimension_semantics=("parallel", "parallel"),
            vmem_limit_bytes=32 * 1024 * 1024,
        ),
    )(patches, w_km, bias, pos, cls)

    # Padded rows S..S_pad hold bias-only garbage; slice them off (fuses under jit).
    return out[:, :S, :]


if __name__ == "__main__":
    # Small, deterministic example consistent with the module:
    # B=2, in_channels=3, img 16x16, patch 4x4 -> n_patches=16, hidden=128.
    B, C, H, W = 2, 3, 16, 16
    ph = pw = 4
    hidden = 128
    n_patches = (H // ph) * (W // pw)

    key = jax.random.PRNGKey(0)
    kx, kw, kb, kc, kp = jax.random.split(key, 5)
    x = jax.random.normal(kx, (B, C, H, W), jnp.float32)
    conv_w = 0.02 * jax.random.normal(kw, (hidden, C, ph, pw), jnp.float32)
    conv_b = 0.02 * jax.random.normal(kb, (hidden,), jnp.float32)
    cls_token = 0.02 * jax.random.normal(kc, (1, 1, hidden), jnp.float32)
    pos_embed = 0.02 * jax.random.normal(kp, (1, n_patches + 1, hidden), jnp.float32)

    out = jax.jit(vit_embeddings)(x, conv_w, conv_b, cls_token, pos_embed)
    out = jax.block_until_ready(out)
    assert out.shape == (B, n_patches + 1, hidden)

    # Reference in f32 on the same bf16-rounded values the kernel feeds the MXU / adds.
    K = C * ph * pw
    pr = _im2col_patches(x.astype(jnp.bfloat16), ph, pw).astype(jnp.float32)
    wr = (jnp.transpose(conv_w, (2, 3, 1, 0)).reshape(K, hidden)
          .astype(jnp.bfloat16).astype(jnp.float32))
    pos_r = pos_embed.astype(jnp.bfloat16).astype(jnp.float32)   # kernel streams pos in bf16
    body = jnp.einsum("bnk,kh->bnh", pr, wr) + conv_b[None, None, :]
    ref = jnp.concatenate([jnp.broadcast_to(cls_token, (B, 1, hidden)), body],
                          axis=1) + pos_r

    max_err = float(jnp.max(jnp.abs(out - ref)))
    assert jnp.allclose(out, ref, rtol=2e-3, atol=2e-3), f"max abs err = {max_err}"
    print("KERNEL_OK")
</pallas_src>

<mosaic_0001>
module attributes {stable_mosaic.version = 11 : i64} {
  func.func @_embed_kernel(%arg0: i32, %arg1: i32, %arg2: memref<2x16x128xbf16, #tpu.memory_space<vmem>>, %arg3: memref<128x128xbf16, #tpu.memory_space<vmem>>, %arg4: memref<1x128xf32, #tpu.memory_space<vmem>>, %arg5: memref<1x16x128xbf16, #tpu.memory_space<vmem>>, %arg6: memref<1x128xf32, #tpu.memory_space<vmem>>, %arg7: memref<2x16x128xf32, #tpu.memory_space<vmem>>) attributes {dimension_semantics = [#tpu.dimension_semantics<parallel>, #tpu.dimension_semantics<parallel>], iteration_bounds = array<i64: 2, 1>, scalar_prefetch = 0 : i64, scratch_operands = 0 : i64, tpu.core_type = #tpu.core_type<tc>, window_params = [{transform_indices = @transform_0, window_bounds = array<i64: 2, 16, 128>}, {pipeline_mode = #tpu.pipeline_mode<synchronous>, transform_indices = @transform_1, window_bounds = array<i64: 128, 128>}, {pipeline_mode = #tpu.pipeline_mode<synchronous>, transform_indices = @transform_2, window_bounds = array<i64: 1, 128>}, {transform_indices = @transform_3, window_bounds = array<i64: 1, 16, 128>}, {pipeline_mode = #tpu.pipeline_mode<synchronous>, transform_indices = @transform_4, window_bounds = array<i64: 1, 128>}, {transform_indices = @transform_5, window_bounds = array<i64: 2, 16, 128>}]} {
    %c0 = arith.constant 0 : index
    %c0_0 = arith.constant 0 : index
    %c0_1 = arith.constant 0 : index
    %0 = vector.load %arg2[%c0, %c0_0, %c0_1] : memref<2x16x128xbf16, #tpu.memory_space<vmem>>, vector<2x16x128xbf16>
    %1 = vector.shape_cast %0 : vector<2x16x128xbf16> to vector<32x128xbf16>
    %c0_2 = arith.constant 0 : index
    %c0_3 = arith.constant 0 : index
    %2 = vector.load %arg3[%c0_2, %c0_3] : memref<128x128xbf16, #tpu.memory_space<vmem>>, vector<128x128xbf16>
    %cst = arith.constant dense<0.000000e+00> : vector<32x128xf32>
    %3 = tpu.matmul %1, %2, %cst {dimension_numbers = #tpu.dot_dimension_numbers<[1], [0], [0], [1], [0, 0, 1, 1], [], []>} : vector<32x128xbf16>, vector<128x128xbf16>, vector<32x128xf32> -> vector<32x128xf32>
    %4 = vector.shape_cast %3 : vector<32x128xf32> to vector<2x16x128xf32>
    %c0_4 = arith.constant 0 : index
    %c0_5 = arith.constant 0 : index
    %c0_6 = arith.constant 0 : index
    %5 = vector.load %arg5[%c0_4, %c0_5, %c0_6] : memref<1x16x128xbf16, #tpu.memory_space<vmem>>, vector<1x16x128xbf16>
    %6 = arith.extf %5 : vector<1x16x128xbf16> to vector<1x16x128xf32>
    %c0_7 = arith.constant 0 : index
    %c0_8 = arith.constant 0 : index
    %7 = vector.load %arg4[%c0_7, %c0_8] : memref<1x128xf32, #tpu.memory_space<vmem>>, vector<1x128xf32>
    %8 = vector.shape_cast %7 : vector<1x128xf32> to vector<1x1x128xf32>
    %9 = vector.broadcast %8 : vector<1x1x128xf32> to vector<2x16x128xf32>
    %10 = arith.addf %4, %9 : vector<2x16x128xf32>
    %11 = vector.broadcast %6 : vector<1x16x128xf32> to vector<2x16x128xf32>
    %12 = arith.addf %10, %11 : vector<2x16x128xf32>
    %c0_9 = arith.constant 0 : index
    %c0_10 = arith.constant 0 : index
    %c0_11 = arith.constant 0 : index
    %13 = vector.load %arg7[%c0_9, %c0_10, %c0_11] : memref<2x16x128xf32, #tpu.memory_space<vmem>>, vector<2x16x128xf32>
    tpu.vector_store %arg7[%c0_9, %c0_10, %c0_11], %12 {strides = array<i32>} : memref<2x16x128xf32, #tpu.memory_space<vmem>>, vector<2x16x128xf32>,
    %c0_i32 = arith.constant 0 : i32
    %14 = arith.cmpi eq, %arg0, %c0_i32 : i32
    %15 = arith.extui %14 : i1 to i32
    %c0_i32_12 = arith.constant 0 : i32
    %16 = arith.cmpi ne, %15, %c0_i32_12 : i32
    scf.if %16 {
      %c0_13 = arith.constant 0 : index
      %c0_14 = arith.constant 0 : index
      %17 = vector.load %arg6[%c0_13, %c0_14] : memref<1x128xf32, #tpu.memory_space<vmem>>, vector<1x128xf32>
      %18 = vector.extract_strided_slice %6 {offsets = [0, 0, 0], sizes = [1, 1, 128], strides = [1, 1, 1]} : vector<1x16x128xf32> to vector<1x1x128xf32>
      %19 = vector.shape_cast %18 : vector<1x1x128xf32> to vector<1x128xf32>
      %20 = arith.addf %17, %19 : vector<1x128xf32>
      %21 = vector.shape_cast %20 : vector<1x128xf32> to vector<1x1x128xf32>
      %22 = vector.shape_cast %21 : vector<1x1x128xf32> to vector<1x1x128xf32>
      %23 = vector.broadcast %22 : vector<1x1x128xf32> to vector<2x1x128xf32>
      %c0_15 = arith.constant 0 : index
      %c0_16 = arith.constant 0 : index
      %c0_17 = arith.constant 0 : index
      %24 = vector.load %arg7[%c0_15, %c0_16, %c0_17] : memref<2x16x128xf32, #tpu.memory_space<vmem>>, vector<2x1x128xf32>
      tpu.vector_store %arg7[%c0_15, %c0_16, %c0_17], %23 {strides = array<i32>} : memref<2x16x128xf32, #tpu.memory_space<vmem>>, vector<2x1x128xf32>,
    } else {
    }
    return
  }
  func.func @transform_0(%arg0: i32, %arg1: i32) -> (i32, i32, i32) {
    %c0_i32 = arith.constant 0 : i32
    %c0_i32_0 = arith.constant 0 : i32
    return %arg1, %arg0, %c0_i32 : i32, i32, i32
  }
  func.func @transform_1(%arg0: i32, %arg1: i32) -> (i32, i32) {
    %c0_i32 = arith.constant 0 : i32
    %c0_i32_0 = arith.constant 0 : i32
    %c0_i32_1 = arith.constant 0 : i32
    return %c0_i32, %c0_i32_0 : i32, i32
  }
  func.func @transform_2(%arg0: i32, %arg1: i32) -> (i32, i32) {
    %c0_i32 = arith.constant 0 : i32
    %c0_i32_0 = arith.constant 0 : i32
    %c0_i32_1 = arith.constant 0 : i32
    return %c0_i32, %c0_i32_0 : i32, i32
  }
  func.func @transform_3(%arg0: i32, %arg1: i32) -> (i32, i32, i32) {
    %c0_i32 = arith.constant 0 : i32
    %c0_i32_0 = arith.constant 0 : i32
    %c0_i32_1 = arith.constant 0 : i32
    return %c0_i32, %arg0, %c0_i32_0 : i32, i32, i32
  }
  func.func @transform_4(%arg0: i32, %arg1: i32) -> (i32, i32) {
    %c0_i32 = arith.constant 0 : i32
    %c0_i32_0 = arith.constant 0 : i32
    %c0_i32_1 = arith.constant 0 : i32
    return %c0_i32, %c0_i32_0 : i32, i32
  }
  func.func @transform_5(%arg0: i32, %arg1: i32) -> (i32, i32, i32) {
    %c0_i32 = arith.constant 0 : i32
    %c0_i32_0 = arith.constant 0 : i32
    return %arg1, %arg0, %c0_i32 : i32, i32, i32
  }
}

</mosaic_0001>

<llo_original>
// kernel: vit_embeddings.1
$region0: #{vit_embeddings.1}
  #allocation0 [shape = 'u32[]', space=smem, size = 0x4, offset = 0x4, fixed_abs, tag = 'smem constant byte address 0x4 - core index']
  #allocation1 [shape = 'u32[144,128]{1,0:T(1,128)}', space=vmem, size = 0x12000, scoped, tag = 'internal scratch']
  %s0 = inlined_call_operand.vmem [shape: bf16[2,32,128], index: 0, kind: input, shape index: {}]
  %s1 = inlined_call_operand.vmem [shape: bf16[128,128], index: 1, kind: input, shape index: {}]
  %s2 = inlined_call_operand.vmem [shape: f32[1,128], index: 2, kind: input, shape index: {}]
  %s3 = inlined_call_operand.vmem [shape: bf16[1,32,128], index: 3, kind: input, shape index: {}]
  %s4 = inlined_call_operand.vmem [shape: f32[1,128], index: 4, kind: input, shape index: {}]
  %s5 = inlined_call_operand.vmem [shape: f32[2,32,128], index: 5, kind: output, shape index: {}]
  %s6 = sld [smem:[#allocation0]]
  $region132: #{vit_embeddings.1} parent=0
    _
  %s8 = ssub.s32 1, %s6
  %s9 = scalar_select 0, %s8, %s6
  $region1: #{vit_embeddings.1} parent=0
    #allocation2 [shape = 'u8[16384]{0}', space=vmem, size = 0x4000, scoped, tag = 'input window, operand 0']
    #allocation3 [shape = 'u8[32768]{0}', space=vmem, size = 0x8000, scoped, tag = 'output window, operand 0']
    loop: start=0, step=1, limit=4
    $region2: #{vit_embeddings.1} parent=1 // loop_pre_header
      _
    $region3: #{vit_embeddings.1} parent=1 // loop_header
      %s11 = sphi 0, %s15
      %p12 = scmp.ge.s32.totalorder %s11, 4
      %s18 = sphi 0, %s30
      %s19 = sphi 0, %s26
      %s20 = sphi 0, %s18
      %s21 = sphi 0, %s19
      %s22 = sphi 0, %s20
      %s23 = sphi 0, %s21
      %s35 = sphi 0, %s37
      %s38 = sphi 0, %s35
      %s39 = sphi 0, %s38
      %s55 = sphi 0, %s39
      %s59 = sphi 0, %s59
      %s61 = sphi 0, %s59
      %s62 = sphi 0, %s61
      %s76 = sphi 0, %s62
      %s80 = sphi 0, %s80
      %s82 = sphi 0, %s80
      %s83 = sphi 0, %s82
      %s97 = sphi 0, %s83
      %s103 = sphi 0, %s105
      %s106 = sphi 0, %s103
      %s107 = sphi 0, %s106
      %s123 = sphi 0, %s107
      %s127 = sphi 0, %s127
      %s129 = sphi 0, %s127
      %s130 = sphi 0, %s129
      %s144 = sphi 0, %s130
      %s152 = sphi 0, %s154
      %s155 = sphi 0, %s152
      %s156 = sphi 0, %s155
      %s172 = sphi 0, %s156
    $region4: #{vit_embeddings.1} parent=1 // loop_header_branch
      %14 = sbr.rel (%p12) target = $region8
    $region5: #{vit_embeddings.1} parent=1 // loop_body
      %s16 = ssub.s32 %s11, 1
      %s17 = ssub.s32 %s11, 2
      %s24 = sadd.s32 1, %s19
      %p25 = scmp.ge.s32.totalorder %s24, 1
      %s26 = scalar_select %p25, 0, %s24
      %s27 = sadd.s32 1, %s18
      %s28 = scalar_select %p25, %s27, %s18
      %p29 = scmp.ge.s32.totalorder %s28, 2
      %s30 = scalar_select %p29, 0, %s28
      %s31 = ssub.s32 %s19, %s26
      %s32 = ssub.s32 %s18, %s30
      %s33 = sor.u32 %s31, %s32
      %p34 = scmp.eq.s32.totalorder %s33, 0
      %s36 = sadd.s32 %s35, 1
      %s37 = scalar_select %p34, %s35, %s36
      %p40 = pneg %p34
      %p41 = scmp.eq.s32.totalorder %s11, 1
      %p42 = por %p40, %p41
      %p43 = scmp.ne.s32.totalorder %s35, %s38
      %p44 = scmp.eq.s32.totalorder %s11, 0
      %p45 = por %p43, %p44
      %p46 = scmp.ne.s32.totalorder %s35, %s38
      %p47 = scmp.eq.s32.totalorder %s16, 1
      %p48 = por %p46, %p47
      %p49 = scmp.ne.s32.totalorder %s38, %s39
      %p50 = scmp.eq.s32.totalorder %s16, 0
      %p51 = por %p49, %p50
      %p52 = scmp.ne.s32.totalorder %s38, %s39
      %p53 = scmp.eq.s32.totalorder %s17, 1
      %p54 = por %p52, %p53
      %p56 = scmp.ne.s32.totalorder %s39, %s55
      %p57 = scmp.eq.s32.totalorder %s17, 0
      %p58 = por %p56, %p57
      %s60 = sadd.s32 %s59, 1
      %p63 = scmp.eq.s32.totalorder %s11, 1
      %p64 = scmp.ne.s32.totalorder %s59, %s61
      %p65 = scmp.eq.s32.totalorder %s11, 0
      %p66 = por %p64, %p65
      %p67 = scmp.ne.s32.totalorder %s59, %s61
      %p68 = scmp.eq.s32.totalorder %s16, 1
      %p69 = por %p67, %p68
      %p70 = scmp.ne.s32.totalorder %s61, %s62
      %p71 = scmp.eq.s32.totalorder %s16, 0
      %p72 = por %p70, %p71
      %p73 = scmp.ne.s32.totalorder %s61, %s62
      %p74 = scmp.eq.s32.totalorder %s17, 1
      %p75 = por %p73, %p74
      %p77 = scmp.ne.s32.totalorder %s62, %s76
      %p78 = scmp.eq.s32.totalorder %s17, 0
      %p79 = por %p77, %p78
      %s81 = sadd.s32 %s80, 1
      %p84 = scmp.eq.s32.totalorder %s11, 1
      %p85 = scmp.ne.s32.totalorder %s80, %s82
      %p86 = scmp.eq.s32.totalorder %s11, 0
      %p87 = por %p85, %p86
      %p88 = scmp.ne.s32.totalorder %s80, %s82
      %p89 = scmp.eq.s32.totalorder %s16, 1
      %p90 = por %p88, %p89
      %p91 = scmp.ne.s32.totalorder %s82, %s83
      %p92 = scmp.eq.s32.totalorder %s16, 0
      %p93 = por %p91, %p92
      %p94 = scmp.ne.s32.totalorder %s82, %s83
      %p95 = scmp.eq.s32.totalorder %s17, 1
      %p96 = por %p94, %p95
      %p98 = scmp.ne.s32.totalorder %s83, %s97
      %p99 = scmp.eq.s32.totalorder %s17, 0
      %p100 = por %p98, %p99
      %s101 = ssub.s32 %s18, %s30
      %p102 = scmp.eq.s32.totalorder %s101, 0
      %s104 = sadd.s32 %s103, 1
      %s105 = scalar_select %p102, %s103, %s104
      %p108 = pneg %p102
      %p109 = scmp.eq.s32.totalorder %s11, 1
      %p110 = por %p108, %p109
      %p111 = scmp.ne.s32.totalorder %s103, %s106
      %p112 = scmp.eq.s32.totalorder %s11, 0
      %p113 = por %p111, %p112
      %p114 = scmp.ne.s32.totalorder %s103, %s106
      %p115 = scmp.eq.s32.totalorder %s16, 1
      %p116 = por %p114, %p115
      %p117 = scmp.ne.s32.totalorder %s106, %s107
      %p118 = scmp.eq.s32.totalorder %s16, 0
      %p119 = por %p117, %p118
      %p120 = scmp.ne.s32.totalorder %s106, %s107
      %p121 = scmp.eq.s32.totalorder %s17, 1
      %p122 = por %p120, %p121
      %p124 = scmp.ne.s32.totalorder %s107, %s123
      %p125 = scmp.eq.s32.totalorder %s17, 0
      %p126 = por %p124, %p125
      %s128 = sadd.s32 %s127, 1
      %p131 = scmp.eq.s32.totalorder %s11, 1
      %p132 = scmp.ne.s32.totalorder %s127, %s129
      %p133 = scmp.eq.s32.totalorder %s11, 0
      %p134 = por %p132, %p133
      %p135 = scmp.ne.s32.totalorder %s127, %s129
      %p136 = scmp.eq.s32.totalorder %s16, 1
      %p137 = por %p135, %p136
      %p138 = scmp.ne.s32.totalorder %s129, %s130
      %p139 = scmp.eq.s32.totalorder %s16, 0
      %p140 = por %p138, %p139
      %p141 = scmp.ne.s32.totalorder %s129, %s130
      %p142 = scmp.eq.s32.totalorder %s17, 1
      %p143 = por %p141, %p142
      %p145 = scmp.ne.s32.totalorder %s130, %s144
      %p146 = scmp.eq.s32.totalorder %s17, 0
      %p147 = por %p145, %p146
      %s148 = ssub.s32 %s19, %s26
      %s149 = ssub.s32 %s18, %s30
      %s150 = sor.u32 %s148, %s149
      %p151 = scmp.eq.s32.totalorder %s150, 0
      %s153 = sadd.s32 %s152, 1
      %s154 = scalar_select %p151, %s152, %s153
      %p157 = pneg %p151
      %p158 = scmp.eq.s32.totalorder %s11, 1
      %p159 = por %p157, %p158
      %p160 = scmp.ne.s32.totalorder %s152, %s155
      %p161 = scmp.eq.s32.totalorder %s11, 0
      %p162 = por %p160, %p161
      %p163 = scmp.ne.s32.totalorder %s152, %s155
      %p164 = scmp.eq.s32.totalorder %s16, 1
      %p165 = por %p163, %p164
      %p166 = scmp.ne.s32.totalorder %s155, %s156
      %p167 = scmp.eq.s32.totalorder %s16, 0
      %p168 = por %p166, %p167
      %p169 = scmp.ne.s32.totalorder %s155, %s156
      %p170 = scmp.eq.s32.totalorder %s17, 1
      %p171 = por %p169, %p170
      %p173 = scmp.ne.s32.totalorder %s156, %s172
      %p174 = scmp.eq.s32.totalorder %s17, 0
      %p175 = por %p173, %p174
      %p176 = scmp.le.s32.totalorder 1, %s11
      %p177 = scmp.lt.s32.totalorder %s11, 3
      %p178 = pnand %p176, %p177
      %p179 = pneg %p178
      // Predicated region
      $region9: #{vit_embeddings.1} parent=5 // pred_check
        _
      $region10: #{vit_embeddings.1} parent=5 // pred_check_branch
        %181 = sbr.rel (%p178) target = $region12
      $region11: #{vit_embeddings.1} parent=5 // pred_region
        %s182 = ssub.s32 %s11, 1
        // Predicated region
        $region13: #{vit_embeddings.1} parent=11 // pred_check
          %p183 = pneg %p72
        $region14: #{vit_embeddings.1} parent=11 // pred_check_branch
          %185 = sbr.rel (%p183) target = $region16
        $region15: #{vit_embeddings.1} parent=11 // pred_region
          _
        $region16: #{vit_embeddings.1} parent=11 // pred_fallthru
          _
        // Predicated region
        $region17: #{vit_embeddings.1} parent=11 // pred_check
          %p186 = pneg %p93
        $region18: #{vit_embeddings.1} parent=11 // pred_check_branch
          %188 = sbr.rel (%p186) target = $region20
        $region19: #{vit_embeddings.1} parent=11 // pred_region
          _
        $region20: #{vit_embeddings.1} parent=11 // pred_fallthru
          _
        // Predicated region
        $region21: #{vit_embeddings.1} parent=11 // pred_check
          %p189 = pneg %p140
        $region22: #{vit_embeddings.1} parent=11 // pred_check_branch
          %191 = sbr.rel (%p189) target = $region24
        $region23: #{vit_embeddings.1} parent=11 // pred_region
          _
        $region24: #{vit_embeddings.1} parent=11 // pred_fallthru
          _
      $region12: #{vit_embeddings.1} parent=5 // pred_fallthru
        _
      %p192 = scmp.lt.s32.totalorder %s11, 2
      // Predicated region
      $region25: #{vit_embeddings.1} parent=5 // pred_check
        %p193 = pneg %p192
      $region26: #{vit_embeddings.1} parent=5 // pred_check_branch
        %195 = sbr.rel (%p193) target = $region28
      $region27: #{vit_embeddings.1} parent=5 // pred_region
        // Predicated region
        $region29: #{vit_embeddings.1} parent=27 // pred_check
          %p196 = pneg %p45
        $region30: #{vit_embeddings.1} parent=27 // pred_check_branch
          %198 = sbr.rel (%p196) target = $region32
        $region31: #{vit_embeddings.1} parent=27 // pred_region
          %s199 = sand.u32 %s35, 1
          %s200 = sand.u32 %s35, 1
          %s201 = smul.addr %s200, 16
          %s202 = scalar_lea.vmem [#allocation2], %s201
          %s203 = smul.u32 2, %s19
          %s204 = smul.u32 2, %s18
          %s205 = smul.addr %s203, 4
          %s206 = sadd.s32 %s204, %s205
          %s207 = smul.addr %s206, 4
          %s208 = scalar_lea.vmem %s0, %s207
          // Predicated region
          $region33: #{vit_embeddings.1} parent=31 // pred_check
            _
          $region34: #{vit_embeddings.1} parent=31 // pred_check_branch
            %210 = sbr.rel (0) target = $region36
          $region35: #{vit_embeddings.1} parent=31 // pred_region
            // Predicated region
            $region37: #{vit_embeddings.1} parent=35 // pred_check
              _
            $region38: #{vit_embeddings.1} parent=35 // pred_check_branch
              %212 = sbr.rel target = $region40
            $region39: #{vit_embeddings.1} parent=35 // pred_region
              // Predicated region
              $region52: #{vit_embeddings.1} parent=39 // pred_check
                _
              $region53: #{vit_embeddings.1} parent=39 // pred_check_branch
                %234 = sbr.rel (0) target = $region55
              $region54: #{vit_embeddings.1} parent=39 // pred_region
                loop: start=0, step=1, limit=1
                $region56: #{vit_embeddings.1} parent=54 // loop_pre_header
                  _
                $region57: #{vit_embeddings.1} parent=54 // loop_header
                  %s236 = sphi 0, %s240
                  %p237 = scmp.ge.s32.totalorder %s236, 1
                  %s241 = sphi %s208, %s208
                  %s242 = sphi %s202, %s202
                $region58: #{vit_embeddings.1} parent=54 // loop_header_branch
                  %239 = sbr.rel (%p237) target = $region62
                $region59: #{vit_embeddings.1} parent=54 // loop_body
                  _
                $region60: #{vit_embeddings.1} parent=54 // loop_footer
                  %s240 = sadd.s32 1, %s236
                $region61: #{vit_embeddings.1} parent=54 // loop_footer_branch
                  %235 = sbr.rel target = $region57
                $region62: #{vit_embeddings.1} parent=54 // loop_exit
                  _
                %s244 = ssub.s32 16, 1
                loop: start=0, step=1, limit=1
                $region63: #{vit_embeddings.1} parent=54 // loop_pre_header
                  _
                $region64: #{vit_embeddings.1} parent=54 // loop_header
                  %s246 = sphi 0, %s250
                  %p247 = scmp.ge.s32.totalorder %s246, 1
                  %s251 = sphi %s208, %s208
                  %s252 = sphi %s202, %s202
                $region65: #{vit_embeddings.1} parent=54 // loop_header_branch
                  %249 = sbr.rel (%p247) target = $region69
                $region66: #{vit_embeddings.1} parent=54 // loop_body
                  %v253 = vld [vmem:[%s251] sm:%s244]
                  %254 = vst [vmem:[%s252] sm:%s244] %v253
                  %v255 = vld [vmem:[%s251 + $0x4] sm:%s244]
                  %256 = vst [vmem:[%s252 + $0x4] sm:%s244] %v255
                  %v257 = vld [vmem:[%s251 + $0x10] sm:%s244]
                  %258 = vst [vmem:[%s252 + $0x8] sm:%s244] %v257
                  %v259 = vld [vmem:[%s251 + $0x14] sm:%s244]
                  %260 = vst [vmem:[%s252 + $0xc] sm:%s244] %v259
                $region67: #{vit_embeddings.1} parent=54 // loop_footer
                  %s250 = sadd.s32 1, %s246
                $region68: #{vit_embeddings.1} parent=54 // loop_footer_branch
                  %245 = sbr.rel target = $region64
                $region69: #{vit_embeddings.1} parent=54 // loop_exit
                  _
              $region55: #{vit_embeddings.1} parent=39 // pred_fallthru
                _
            $region40: #{vit_embeddings.1} parent=35 // pred_fallthru
              _
            // Predicated region
            $region41: #{vit_embeddings.1} parent=35 // pred_check
              _
            $region42: #{vit_embeddings.1} parent=35 // pred_check_branch
              %214 = sbr.rel (0) target = $region44
            $region43: #{vit_embeddings.1} parent=35 // pred_region
              %s216 = ssub.s32 16, 1
              loop: start=0, step=1, limit=1
              $region45: #{vit_embeddings.1} parent=43 // loop_pre_header
                _
              $region46: #{vit_embeddings.1} parent=43 // loop_header
                %s218 = sphi 0, %s222
                %p219 = scmp.ge.s32.totalorder %s218, 1
                %s223 = sphi %s208, %s208
                %s224 = sphi %s202, %s202
              $region47: #{vit_embeddings.1} parent=43 // loop_header_branch
                %221 = sbr.rel (%p219) target = $region51
              $region48: #{vit_embeddings.1} parent=43 // loop_body
                %v225 = vld [vmem:[%s223] sm:%s216]
                %226 = vst [vmem:[%s224] sm:%s216] %v225
                %v227 = vld [vmem:[%s223 + $0x4] sm:%s216]
                %228 = vst [vmem:[%s224 + $0x4] sm:%s216] %v227
                %v229 = vld [vmem:[%s223 + $0x10] sm:%s216]
                %230 = vst [vmem:[%s224 + $0x8] sm:%s216] %v229
                %v231 = vld [vmem:[%s223 + $0x14] sm:%s216]
                %232 = vst [vmem:[%s224 + $0xc] sm:%s216] %v231
              $region49: #{vit_embeddings.1} parent=43 // loop_footer
                %s222 = sadd.s32 1, %s218
              $region50: #{vit_embeddings.1} parent=43 // loop_footer_branch
                %217 = sbr.rel target = $region46
              $region51: #{vit_embeddings.1} parent=43 // loop_exit
                _
            $region44: #{vit_embeddings.1} parent=35 // pred_fallthru
              _
          $region36: #{vit_embeddings.1} parent=31 // pred_fallthru
            _
          %261 = vnop
        $region32: #{vit_embeddings.1} parent=27 // pred_fallthru
          _
        // Predicated region
        $region70: #{vit_embeddings.1} parent=27 // pred_check
          %p262 = pneg %p113
        $region71: #{vit_embeddings.1} parent=27 // pred_check_branch
          %264 = sbr.rel (%p262) target = $region73
        $region72: #{vit_embeddings.1} parent=27 // pred_region
          %s265 = smul.u32 2, %s18
          %p266 = scmp.lt.s32.totalorder %s265, 3
          %s267 = scalar_select %p266, %s265, 3
          %s268 = smul.addr %s267, 4
          %s269 = scalar_lea.vmem %s3, %s268
          %s270 = smul.u32 2, %s18
        $region73: #{vit_embeddings.1} parent=27 // pred_fallthru
          _
      $region28: #{vit_embeddings.1} parent=5 // pred_fallthru
        _
      %p271 = scmp.le.s32.totalorder 1, %s11
      %p272 = scmp.lt.s32.totalorder %s11, 3
      %p273 = pnand %p271, %p272
      %p274 = pneg %p273
      // Predicated region
      $region74: #{vit_embeddings.1} parent=5 // pred_check
        _
      $region75: #{vit_embeddings.1} parent=5 // pred_check_branch
        %276 = sbr.rel (%p273) target = $region77
      $region76: #{vit_embeddings.1} parent=5 // pred_region
        %s277 = ssub.s32 %s11, 1
        %s278 = sand.u32 %s38, 1
        %s279 = sand.u32 %s38, 1
        %s280 = smul.addr %s279, 16
        %s281 = scalar_lea.vmem [#allocation2], %s280
        // Predicated region
        $region78: #{vit_embeddings.1} parent=76 // pred_check
          %p282 = pneg %p51
        $region79: #{vit_embeddings.1} parent=76 // pred_check_branch
          %284 = sbr.rel (%p282) target = $region81
        $region80: #{vit_embeddings.1} parent=76 // pred_region
          _
        $region81: #{vit_embeddings.1} parent=76 // pred_fallthru
          _
        %s285 = sand.u32 %s38, 1
        %s286 = sand.u32 %s38, 1
        %s287 = smul.addr %s286, 16
        %s288 = scalar_lea.vmem [#allocation2], %s287
        %p289 = pneg %p51
        %p290 = pneg %p48
        %p291 = pneg %p72
        %p292 = pneg %p69
        %p293 = pneg %p93
        %p294 = pneg %p90
        %s295 = smul.u32 2, %s20
        %p296 = scmp.lt.s32.totalorder %s295, 3
        %s297 = scalar_select %p296, %s295, 3
        %s298 = smul.addr %s297, 4
        %s299 = scalar_lea.vmem %s3, %s298
        %p300 = pneg %p119
        %p301 = pneg %p116
        %p302 = pneg %p140
        %p303 = pneg %p137
        %p304 = pneg %p168
        %p305 = pneg %p165
        %s306 = sand.u32 %s155, 1
        %s307 = sand.u32 %s155, 1
        %s308 = smul.addr %s307, 32
        %s309 = scalar_lea.vmem [#allocation3], %s308
        %s310 = smul.u32 2, %s21
        %s311 = smul.u32 2, %s20
        %s312 = smul.u32 2, %s20
        %p313 = scmp.lt.s32.totalorder %s312, 3
        %s314 = scalar_select %p313, %s312, 3
        %s315 = smul.addr %s314, 4
        %s316 = scalar_lea.vmem %s3, %s315
        %s317 = smul.u32 2, %s20
        %s318 = smul.u32 2, %s21
        %s319 = smul.u32 2, %s20
        %v321 = vld [vmem:[%s281] sm:$0xf]
        %v322 = vld [vmem:[%s281 + $0x4] sm:$0xf]
        %v323 = vld [vmem:[%s281 + $0x8] sm:$0xf]
        %v324 = vld [vmem:[%s281 + $0xc] sm:$0xf]
        %v325 = vld [vmem:[%s1] sm:$0xf]
        %v326 = vld [vmem:[%s1 + $0x4] sm:$0xf]
        %v327 = vld [vmem:[%s1 + $0x8] sm:$0xf]
        %v328 = vld [vmem:[%s1 + $0xc] sm:$0xf]
        %v329 = vld [vmem:[%s1 + $0x10] sm:$0xf]
        %v330 = vld [vmem:[%s1 + $0x14] sm:$0xf]
        %v331 = vld [vmem:[%s1 + $0x18] sm:$0xf]
        %v332 = vld [vmem:[%s1 + $0x1c] sm:$0xf]
        %v333 = vld [vmem:[%s1 + $0x20] sm:$0xf]
        %v334 = vld [vmem:[%s1 + $0x24] sm:$0xf]
        %v335 = vld [vmem:[%s1 + $0x28] sm:$0xf]
        %v336 = vld [vmem:[%s1 + $0x2c] sm:$0xf]
        %v337 = vld [vmem:[%s1 + $0x30] sm:$0xf]
        %v338 = vld [vmem:[%s1 + $0x34] sm:$0xf]
        %v339 = vld [vmem:[%s1 + $0x38] sm:$0xf]
        %v340 = vld [vmem:[%s1 + $0x3c] sm:$0xf]
        %v345 = vunpack.c.l.b16 %v321
        %v346 = vunpack.c.l.b16 %v322
        %v347 = vunpack.c.l.b16 %v323
        %v348 = vunpack.c.l.b16 %v324
        %v349 = vpack.c.b16 %v346, %v345
        %v350 = vpack.c.b16 %v348, %v347
        %v369 = vunpack.c.l.b16 %v325
        %v370 = vunpack.c.l.b16 %v326
        %v371 = vunpack.c.l.b16 %v327
        %v372 = vunpack.c.l.b16 %v328
        %v373 = vunpack.c.l.b16 %v329
        %v374 = vunpack.c.l.b16 %v330
        %v375 = vunpack.c.l.b16 %v331
        %v376 = vunpack.c.l.b16 %v332
        %v377 = vunpack.c.l.b16 %v333
        %v378 = vunpack.c.l.b16 %v334
        %v379 = vunpack.c.l.b16 %v335
        %v380 = vunpack.c.l.b16 %v336
        %v381 = vunpack.c.l.b16 %v337
        %v382 = vunpack.c.l.b16 %v338
        %v383 = vunpack.c.l.b16 %v339
        %v384 = vunpack.c.l.b16 %v340
        %v385 = vpack.c.b16 %v370, %v369
        %v386 = vpack.c.b16 %v372, %v371
        %v387 = vpack.c.b16 %v374, %v373
        %v388 = vpack.c.b16 %v376, %v375
        %v389 = vpack.c.b16 %v378, %v377
        %v390 = vpack.c.b16 %v380, %v379
        %v391 = vpack.c.b16 %v382, %v381
        %v392 = vpack.c.b16 %v384, %v383
        %401 = vmatprep.subr.bf16.mxu0 0
        %402 = vmatpush1.bf16.msra.mxu0 %v392
        %403 = vmatprep.subr.bf16.mxu0 0
        %404 = vmatpush1.bf16.msra.mxu0 %v391
        %405 = vmatprep.subr.bf16.mxu0 0
        %406 = vmatpush1.bf16.msra.mxu0 %v390
        %407 = vmatprep.subr.bf16.mxu0 0
        %408 = vmatpush1.bf16.msra.mxu0 %v389
        %409 = vmatprep.subr.bf16.mxu0 0
        %410 = vmatpush1.bf16.msra.mxu0 %v388
        %411 = vmatprep.subr.bf16.mxu0 0
        %412 = vmatpush1.bf16.msra.mxu0 %v387
        %413 = vmatprep.subr.bf16.mxu0 0
        %414 = vmatpush1.bf16.msra.mxu0 %v386
        %415 = vmatprep.subr.bf16.mxu0 0
        %416 = vmatpush1.bf16.msra.mxu0 %v385
        %417 = vmatprep.subr.bf16.mxu0 0
        %418 = vmatpush2.bf16.msra.mxu0 0
        %419 = vmatprep.subr.bf16.mxu0 0
        %420 = vmatpush2.bf16.msra.mxu0 0
        %421 = vmatprep.subr.bf16.mxu0 0
        %422 = vmatpush2.bf16.msra.mxu0 0
        %423 = vmatprep.subr.bf16.mxu0 0
        %424 = vmatpush2.bf16.msra.mxu0 0
        %425 = vmatprep.subr.bf16.mxu0 0
        %426 = vmatpush2.bf16.msra.mxu0 0
        %427 = vmatprep.subr.bf16.mxu0 0
        %428 = vmatpush2.bf16.msra.mxu0 0
        %429 = vmatprep.subr.bf16.mxu0 0
        %430 = vmatpush2.bf16.msra.mxu0 0
        %431 = vmatprep.subr.bf16.mxu0 0
        %432 = vmatpush2.bf16.msra.mxu0 0
        %433 = vmatprep.mubr.bf16.mxu0 0
        %434 = vmatmul.mubr.bf16.gmra.mxu0 %v349
        %v435 = vpop.f32.mrf.mxu0
        %v436 = vadd.f32 0.0, %v435
        %v437 = vpop.f32.mrf.mxu0
        %v438 = vpop.f32.mrf.mxu0
        %v439 = vadd.f32 0.0, %v438
        %v440 = vpop.f32.mrf.mxu0
        %441 = vmatprep.mubr.bf16.mxu0 0
        %442 = vmatmul.mubr.bf16.gmra.mxu0 %v350
        %v443 = vpop.f32.mrf.mxu0
        %v444 = vadd.f32 0.0, %v443
        %v445 = vpop.f32.mrf.mxu0
        %v446 = vpop.f32.mrf.mxu0
        %v447 = vadd.f32 0.0, %v446
        %v448 = vpop.f32.mrf.mxu0
        %449 = vdwg.mxu0
        %v450 = vld [vmem:[%s316] sm:$0xf]
        %v451 = vld [vmem:[%s316 + $0x4] sm:$0xf]
        %v452 = vunpack.c.l.bf16 %v450
        %v453 = vunpack.c.l.bf16 %v451
        %v454 = vld [vmem:[%s2] sm:$0x1]
        %v456 = vlaneseq
        %v457 = vshrl.u32 %v456, 7
        %v458 = vsub.s32 0, %v457
        %v459 = vrot.slane %v454, %v458
        %v461 = vadd.f32 %v436, %v459
        %v462 = vadd.f32 %v439, %v459
        %v463 = vadd.f32 %v444, %v459
        %v464 = vadd.f32 %v447, %v459
        %v465 = vadd.f32 %v461, %v452
        %v466 = vadd.f32 %v462, %v453
        %v467 = vadd.f32 %v463, %v452
        %v468 = vadd.f32 %v464, %v453
        %469 = vst [vmem:[%s309] sm:$0xff] %v465
        %470 = vst [vmem:[%s309 + $0x8] sm:$0xff] %v466
        %471 = vst [vmem:[%s309 + $0x10] sm:$0xff] %v467
        %472 = vst [vmem:[%s309 + $0x18] sm:$0xff] %v468
        %p473 = scmp.eq.s32.totalorder %s20, 0
        // Predicated region
        $region82: #{vit_embeddings.1} parent=76 // pred_check
          %p474 = pneg %p473
        $region83: #{vit_embeddings.1} parent=76 // pred_check_branch
          %476 = sbr.rel (%p474) target = $region85
        $region84: #{vit_embeddings.1} parent=76 // pred_region
          %v477 = vld [vmem:[%s4] sm:$0x1]
          %v478 = vadd.f32 %v477, %v452
          %479 = vst [vmem:[%s309] sm:$0x1] %v478
          %480 = vst [vmem:[%s309 + $0x10] sm:$0x1] %v478
        $region85: #{vit_embeddings.1} parent=76 // pred_fallthru
          _
        %s481 = sand.u32 %s155, 1
        %s482 = sand.u32 %s155, 1
        %s483 = smul.addr %s482, 32
        %s484 = scalar_lea.vmem [#allocation3], %s483
        // Predicated region
        $region86: #{vit_embeddings.1} parent=76 // pred_check
          %p485 = pneg %p165
        $region87: #{vit_embeddings.1} parent=76 // pred_check_branch
          %487 = sbr.rel (%p485) target = $region89
        $region88: #{vit_embeddings.1} parent=76 // pred_region
          %s488 = smul.u32 2, %s21
          %s489 = smul.u32 2, %s20
          %s490 = smul.addr %s488, 4
          %s491 = sadd.s32 %s489, %s490
          %s492 = smul.addr %s491, 8
          %s493 = scalar_lea.vmem %s5, %s492
          // Predicated region
          $region90: #{vit_embeddings.1} parent=88 // pred_check
            _
          $region91: #{vit_embeddings.1} parent=88 // pred_check_branch
            %495 = sbr.rel (0) target = $region93
          $region92: #{vit_embeddings.1} parent=88 // pred_region
            // Predicated region
            $region94: #{vit_embeddings.1} parent=92 // pred_check
              _
            $region95: #{vit_embeddings.1} parent=92 // pred_check_branch
              %497 = sbr.rel (0) target = $region97
            $region96: #{vit_embeddings.1} parent=92 // pred_region
              // Predicated region
              $region109: #{vit_embeddings.1} parent=96 // pred_check
                _
              $region110: #{vit_embeddings.1} parent=96 // pred_check_branch
                %519 = sbr.rel (0) target = $region112
              $region111: #{vit_embeddings.1} parent=96 // pred_region
                loop: start=0, step=1, limit=1
                $region113: #{vit_embeddings.1} parent=111 // loop_pre_header
                  _
                $region114: #{vit_embeddings.1} parent=111 // loop_header
                  %s521 = sphi 0, %s525
                  %p522 = scmp.ge.s32.totalorder %s521, 1
                  %s526 = sphi %s484, %s484
                  %s527 = sphi %s493, %s493
                $region115: #{vit_embeddings.1} parent=111 // loop_header_branch
                  %524 = sbr.rel (%p522) target = $region119
                $region116: #{vit_embeddings.1} parent=111 // loop_body
                  %v528 = vld [vmem:[%s526] sm:$0xff]
                  %529 = vst [vmem:[%s527] sm:$0xff] %v528
                  %v530 = vld [vmem:[%s526 + $0x8] sm:$0xff]
                  %531 = vst [vmem:[%s527 + $0x8] sm:$0xff] %v530
                  %v532 = vld [vmem:[%s526 + $0x10] sm:$0xff]
                  %533 = vst [vmem:[%s527 + $0x20] sm:$0xff] %v532
                  %v534 = vld [vmem:[%s526 + $0x18] sm:$0xff]
                  %535 = vst [vmem:[%s527 + $0x28] sm:$0xff] %v534
                $region117: #{vit_embeddings.1} parent=111 // loop_footer
                  %s525 = sadd.s32 1, %s521
                $region118: #{vit_embeddings.1} parent=111 // loop_footer_branch
                  %520 = sbr.rel target = $region114
                $region119: #{vit_embeddings.1} parent=111 // loop_exit
                  _
              $region112: #{vit_embeddings.1} parent=96 // pred_fallthru
                _
              // Predicated region
              $region120: #{vit_embeddings.1} parent=96 // pred_check
                _
              $region121: #{vit_embeddings.1} parent=96 // pred_check_branch
                %537 = sbr.rel target = $region123
              $region122: #{vit_embeddings.1} parent=96 // pred_region
                _
              $region123: #{vit_embeddings.1} parent=96 // pred_fallthru
                _
            $region97: #{vit_embeddings.1} parent=92 // pred_fallthru
              _
            // Predicated region
            $region98: #{vit_embeddings.1} parent=92 // pred_check
              _
            $region99: #{vit_embeddings.1} parent=92 // pred_check_branch
              %499 = sbr.rel target = $region101
            $region100: #{vit_embeddings.1} parent=92 // pred_region
              %s501 = ssub.s32 256, 1
              loop: start=0, step=1, limit=1
              $region102: #{vit_embeddings.1} parent=100 // loop_pre_header
                _
              $region103: #{vit_embeddings.1} parent=100 // loop_header
                %s503 = sphi 0, %s507
                %p504 = scmp.ge.s32.totalorder %s503, 1
                %s508 = sphi %s484, %s484
                %s509 = sphi %s493, %s493
              $region104: #{vit_embeddings.1} parent=100 // loop_header_branch
                %506 = sbr.rel (%p504) target = $region108
              $region105: #{vit_embeddings.1} parent=100 // loop_body
                %v510 = vld [vmem:[%s508] sm:%s501]
                %511 = vst [vmem:[%s509] sm:%s501] %v510
                %v512 = vld [vmem:[%s508 + $0x8] sm:%s501]
                %513 = vst [vmem:[%s509 + $0x8] sm:%s501] %v512
                %v514 = vld [vmem:[%s508 + $0x10] sm:%s501]
                %515 = vst [vmem:[%s509 + $0x20] sm:%s501] %v514
                %v516 = vld [vmem:[%s508 + $0x18] sm:%s501]
                %517 = vst [vmem:[%s509 + $0x28] sm:%s501] %v516
              $region106: #{vit_embeddings.1} parent=100 // loop_footer
                %s507 = sadd.s32 1, %s503
              $region107: #{vit_embeddings.1} parent=100 // loop_footer_branch
                %502 = sbr.rel target = $region103
              $region108: #{vit_embeddings.1} parent=100 // loop_exit
                _
            $region101: #{vit_embeddings.1} parent=92 // pred_fallthru
              _
          $region93: #{vit_embeddings.1} parent=88 // pred_fallthru
            _
          %538 = vnop
        $region89: #{vit_embeddings.1} parent=76 // pred_fallthru
          _
      $region77: #{vit_embeddings.1} parent=5 // pred_fallthru
        _
      %p539 = scmp.le.s32.totalorder 2, %s11
      // Predicated region
      $region124: #{vit_embeddings.1} parent=5 // pred_check
        %p540 = pneg %p539
      $region125: #{vit_embeddings.1} parent=5 // pred_check_branch
        %542 = sbr.rel (%p540) target = $region127
      $region126: #{vit_embeddings.1} parent=5 // pred_region
        %s543 = ssub.s32 %s11, 2
        // Predicated region
        $region128: #{vit_embeddings.1} parent=126 // pred_check
          %p544 = pneg %p171
        $region129: #{vit_embeddings.1} parent=126 // pred_check_branch
          %546 = sbr.rel (%p544) target = $region131
        $region130: #{vit_embeddings.1} parent=126 // pred_region
          %s547 = sand.u32 %s156, 1
          %s548 = sand.u32 %s156, 1
          %s549 = smul.addr %s548, 32
          %s550 = scalar_lea.vmem [#allocation3], %s549
        $region131: #{vit_embeddings.1} parent=126 // pred_fallthru
          _
      $region127: #{vit_embeddings.1} parent=5 // pred_fallthru
        _
    $region6: #{vit_embeddings.1} parent=1 // loop_footer
      %s15 = sadd.s32 1, %s11
    $region7: #{vit_embeddings.1} parent=1 // loop_footer_branch
      %10 = sbr.rel target = $region3
    $region8: #{vit_embeddings.1} parent=1 // loop_exit
      _

</llo_original>
